<compile_context>
chip_gen: v6e
topology: v6e:2x2x1
jax: 0.10.0
libtpu: 0.0.40
codegen_flags: <defaults>
</compile_context>

<pallas_src>
import functools

import jax
import jax.numpy as jnp
from jax import lax
from jax.experimental import pallas as pl
from jax.experimental.pallas import tpu as pltpu


_VMEM_LIMIT = 32 * 1024 * 1024    # explicit scoped-VMEM cap (safe on v5e / v6e / v7x)
_VMEM_BUDGET = 14 * 1024 * 1024   # what the tile chooser may spend (double-buffered blocks)


def _round_up(x, n):
    return ((x + n - 1) // n) * n


@functools.lru_cache(maxsize=1)
def compute_dtype():
    """bf16 matmul operands on v6e/v7x (f32 accumulate); keep f32 on v5e."""
    try:
        kind = jax.devices()[0].device_kind.lower()
    except Exception:
        kind = ""
    if "v5 lite" in kind or "v5lite" in kind or "v5e" in kind:
        return jnp.float32
    return jnp.bfloat16


# ----------------------------------------------------------------------------
# Pallas kernel: fused (multi-slab) matmul + bias + optional ReLU-in / residual / Tanh
# ----------------------------------------------------------------------------
def _make_kernel(n_in, relu_in, add_res, act):
    """out[m, co] = act( sum_i relu?(slab_i[m, :]) @ w_i[:, co] + b[co] (+ res[m, co]) )."""

    def kernel(*refs):
        taps_refs = refs[:n_in]
        w_refs = refs[n_in:2 * n_in]
        b_ref = refs[2 * n_in]
        res_ref = refs[2 * n_in + 1] if add_res else None
        out_ref = refs[-1]

        acc = jnp.zeros(out_ref.shape, jnp.float32)
        for i in range(n_in):                         # n_in is 1 or 2 (unrolled)
            t = taps_refs[i][...]                     # (TM, KK*Cin_i), bf16 or f32
            if relu_in:
                t = jnp.maximum(t, 0)
            acc = acc + jnp.dot(t, w_refs[i][...],    # single folded K contraction
                                preferred_element_type=jnp.float32)
        acc = acc + b_ref[...]                        # (1, Cout) broadcast, f32
        if add_res:
            acc = acc + res_ref[...]                  # fused residual add (f32)
        if act == "tanh":
            acc = jnp.tanh(acc)
        out_ref[...] = acc.astype(out_ref.dtype)

    return kernel


def _make_dual_kernel(n_in):
    """Two convs sharing one im2col slab read:
       out_a = relu(slab) @ Wa + ba   (conv_block first conv)
       out_b =      slab  @ Wb + bb   (conv_skip)"""

    def kernel(*refs):
        taps_refs = refs[:n_in]
        wa_refs = refs[n_in:2 * n_in]
        wb_refs = refs[2 * n_in:3 * n_in]
        ba_ref = refs[3 * n_in]
        bb_ref = refs[3 * n_in + 1]
        oa_ref, ob_ref = refs[-2], refs[-1]

        acc_a = jnp.zeros(oa_ref.shape, jnp.float32)
        acc_b = jnp.zeros(ob_ref.shape, jnp.float32)
        for i in range(n_in):                         # n_in is 1 or 2 (unrolled)
            t = taps_refs[i][...]                     # loaded ONCE per tile
            acc_b = acc_b + jnp.dot(t, wb_refs[i][...],
                                    preferred_element_type=jnp.float32)
            tr = jnp.maximum(t, 0)                    # VPU, hidden under MXU
            acc_a = acc_a + jnp.dot(tr, wa_refs[i][...],
                                    preferred_element_type=jnp.float32)
        oa_ref[...] = (acc_a + ba_ref[...]).astype(oa_ref.dtype)
        ob_ref[...] = (acc_b + bb_ref[...]).astype(ob_ref.dtype)

    return kernel


def _choose_tm(m, row_bytes, fixed_bytes):
    """Largest power-of-two row tile that keeps double-buffered blocks in budget,
    split into >=2 grid steps whenever the problem is big enough (megacore)."""
    tm = 1024
    while tm > 8 and fixed_bytes + 2 * tm * row_bytes > _VMEM_BUDGET:
        tm //= 2
    mp = _round_up(m, 8)
    if mp <= tm:
        tm = mp if mp <= 16 else _round_up(-(-mp // 2), 8)
    return max(8, tm)


def conv_matmul(slabs, wmats, b, relu_in=False, act=None, residual=None):
    """slabs: list of (M, K_i); wmats: list of (K_i, Cout); b: (Cout,);
    residual: optional (M, Cout) added before the activation.  Returns (M, Cout) f32."""
    m = slabs[0].shape[0]
    cout = wmats[0].shape[-1]
    n_in = len(slabs)
    in_item = slabs[0].dtype.itemsize
    k_total = sum(s.shape[1] for s in slabs)

    row_bytes = k_total * in_item + cout * 4 + (cout * 4 if residual is not None else 0)
    fixed_bytes = 2 * k_total * cout * in_item + 2 * cout * 4
    tm = _choose_tm(m, row_bytes, fixed_bytes)
    mp = _round_up(m, tm)
    grid = (mp // tm,)

    def pad_rows(a):
        return a if a.shape[0] == mp else jnp.pad(a, ((0, mp - a.shape[0]), (0, 0)))

    args = ([pad_rows(s) for s in slabs] + list(wmats)
            + [b.reshape(1, cout).astype(jnp.float32)])
    in_specs = ([pl.BlockSpec((tm, s.shape[1]), lambda i: (i, 0)) for s in slabs]
                + [pl.BlockSpec((w.shape[0], cout), lambda i: (0, 0)) for w in wmats]
                + [pl.BlockSpec((1, cout), lambda i: (0, 0))])
    if residual is not None:
        args.append(pad_rows(residual.astype(jnp.float32)))
        in_specs.append(pl.BlockSpec((tm, cout), lambda i: (i, 0)))

    cost = pl.CostEstimate(
        flops=2 * mp * k_total * cout,
        transcendentals=(mp * cout if act == "tanh" else 0),
        bytes_accessed=sum(int(a.size) * a.dtype.itemsize for a in args) + mp * cout * 4)

    out = pl.pallas_call(
        _make_kernel(n_in, relu_in, residual is not None, act),
        out_shape=jax.ShapeDtypeStruct((mp, cout), jnp.float32),
        grid=grid,
        in_specs=in_specs,
        out_specs=pl.BlockSpec((tm, cout), lambda i: (i, 0)),
        compiler_params=pltpu.CompilerParams(
            dimension_semantics=("parallel",),
            vmem_limit_bytes=_VMEM_LIMIT),
        cost_estimate=cost,
    )(*args)
    return out if mp == m else out[:m]


def conv_matmul_dual(slabs, wa, wb, ba, bb):
    """Two Cout-matched convs sharing one slab read.
    Returns (ya, yb) f32: ya = relu(slab)@Wa + ba, yb = slab@Wb + bb."""
    m = slabs[0].shape[0]
    cout = wa[0].shape[-1]
    assert wb[0].shape[-1] == cout
    n_in = len(slabs)
    in_item = slabs[0].dtype.itemsize
    k_total = sum(s.shape[1] for s in slabs)

    row_bytes = k_total * in_item + 2 * cout * 4
    fixed_bytes = 4 * k_total * cout * in_item + 4 * cout * 4
    tm = _choose_tm(m, row_bytes, fixed_bytes)
    mp = _round_up(m, tm)
    grid = (mp // tm,)

    def pad_rows(a):
        return a if a.shape[0] == mp else jnp.pad(a, ((0, mp - a.shape[0]), (0, 0)))

    args = ([pad_rows(s) for s in slabs] + list(wa) + list(wb)
            + [ba.reshape(1, cout).astype(jnp.float32),
               bb.reshape(1, cout).astype(jnp.float32)])
    in_specs = ([pl.BlockSpec((tm, s.shape[1]), lambda i: (i, 0)) for s in slabs]
                + [pl.BlockSpec((w.shape[0], cout), lambda i: (0, 0)) for w in (list(wa) + list(wb))]
                + [pl.BlockSpec((1, cout), lambda i: (0, 0))] * 2)

    cost = pl.CostEstimate(
        flops=2 * 2 * mp * k_total * cout,
        transcendentals=0,
        bytes_accessed=sum(int(a.size) * a.dtype.itemsize for a in args) + 2 * mp * cout * 4)

    ya, yb = pl.pallas_call(
        _make_dual_kernel(n_in),
        out_shape=(jax.ShapeDtypeStruct((mp, cout), jnp.float32),
                   jax.ShapeDtypeStruct((mp, cout), jnp.float32)),
        grid=grid,
        in_specs=in_specs,
        out_specs=(pl.BlockSpec((tm, cout), lambda i: (i, 0)),
                   pl.BlockSpec((tm, cout), lambda i: (i, 0))),
        compiler_params=pltpu.CompilerParams(
            dimension_semantics=("parallel",),
            vmem_limit_bytes=_VMEM_LIMIT),
        cost_estimate=cost,
    )(*args)
    if mp != m:
        ya, yb = ya[:m], yb[:m]
    return ya, yb


# ----------------------------------------------------------------------------
# Conv wrappers (padding / im2col is glue; the matmul + epilogue is Pallas)
# ----------------------------------------------------------------------------
def _im2col(xs, ws, stride, padding, pad_mode, dt):
    """Build one lane-dense (M, KK*Cin_i) slab per input plus (KK*Cin_i, Cout) weights."""
    n = xs[0].shape[0]
    cout, _, kh, kw = ws[0].shape
    slabs, wmats = [], []
    ho = wo = None
    for x, w in zip(xs, ws):
        cin = x.shape[-1]
        xc = x.astype(dt)                                  # cast once, before im2col
        if padding > 0:
            mode = "reflect" if pad_mode == "reflect" else "constant"
            xc = jnp.pad(xc, ((0, 0), (padding, padding), (padding, padding), (0, 0)),
                         mode=mode)
        hp, wp = xc.shape[1], xc.shape[2]
        ho = (hp - kh) // stride + 1
        wo = (wp - kw) // stride + 1
        taps = [xc[:, dy:dy + (ho - 1) * stride + 1:stride,
                    dx:dx + (wo - 1) * stride + 1:stride, :]
                for dy in range(kh) for dx in range(kw)]
        # single lane-dense (M, KK*Cin) slab, K ordered (dy, dx, cin)
        slabs.append(jnp.concatenate(taps, axis=-1).reshape(n * ho * wo, kh * kw * cin))
        wmats.append(jnp.transpose(w, (2, 3, 1, 0)).reshape(kh * kw * cin, cout).astype(dt))
    return slabs, wmats, n, ho, wo, cout


def conv2d(xs, ws, b, stride=1, padding=1, pad_mode="reflect",
           relu_in=False, act=None, residual=None):
    """Fused conv.
    xs: list of NHWC inputs sharing (N,H,W) — more than one == implicit channel concat.
    ws: matching list of PyTorch-layout weights (Cout, Cin_i, KH, KW).
    b : (Cout,).  residual: optional NHWC tensor added before the activation."""
    dt = compute_dtype()
    slabs, wmats, n, ho, wo, cout = _im2col(xs, ws, stride, padding, pad_mode, dt)
    out = conv_matmul(slabs, wmats, b, relu_in=relu_in, act=act,
                      residual=None if residual is None else residual.reshape(-1, cout))
    return out.reshape(n, ho, wo, cout)


def conv2d_dual(xs, ws_a, ws_b, b_a, b_b, stride=1, padding=1, pad_mode="reflect"):
    """Two convs over the SAME input(s), fused into one pallas_call:
    ya = conv(relu(x), ws_a) + b_a ;  yb = conv(x, ws_b) + b_b."""
    dt = compute_dtype()
    slabs, wa, n, ho, wo, cout = _im2col(xs, ws_a, stride, padding, pad_mode, dt)
    wb = [jnp.transpose(w, (2, 3, 1, 0)).reshape(w.shape[2] * w.shape[3] * w.shape[1],
                                                 w.shape[0]).astype(dt) for w in ws_b]
    ya, yb = conv_matmul_dual(slabs, wa, wb, b_a, b_b)
    return ya.reshape(n, ho, wo, cout), yb.reshape(n, ho, wo, cout)


def conv_transpose2x2(x, w, b):
    """ConvTranspose2d(kernel=2, stride=2).  w: PyTorch layout (Cin, Cout, 2, 2)."""
    dt = compute_dtype()
    n, h, wid, cin = x.shape
    cout = w.shape[1]
    slab = x.reshape(n * h * wid, cin).astype(dt)
    w2 = w.reshape(cin, cout * 4).astype(dt)           # column order: (co, dy, dx)
    b2 = jnp.repeat(b, 4)
    y = conv_matmul([slab], [w2], b2)                  # (M, Cout*4), lane-dense output
    y = y.reshape(n, h, wid, cout, 2, 2)
    y = jnp.transpose(y, (0, 1, 4, 2, 5, 3))           # N, H, dy, W, dx, Cout
    return y.reshape(n, 2 * h, 2 * wid, cout)


# ----------------------------------------------------------------------------
# RUnet forward
# ----------------------------------------------------------------------------
def residual_conv(x, p, stride):
    # conv_block's first conv and conv_skip share one im2col read (dual kernel);
    # the skip add is fused into the second conv's epilogue.
    h, skip = conv2d_dual([x], [p["conv1"]["w"]], [p["skip"]["w"]],
                          p["conv1"]["b"], p["skip"]["b"], stride, 1, "reflect")
    return conv2d([h], [p["conv2"]["w"]], p["conv2"]["b"], 1, 1, "reflect",
                  relu_in=True, residual=skip)


def residual_conv_cat(u, d, p):
    """ResidualConv on channel-concat([u, d]) without materializing the concat:
    the weight is split along Cin and the two dots are summed in-kernel."""
    cu = u.shape[-1]
    h, skip = conv2d_dual([u, d],
                          [p["conv1"]["w"][:, :cu], p["conv1"]["w"][:, cu:]],
                          [p["skip"]["w"][:, :cu], p["skip"]["w"][:, cu:]],
                          p["conv1"]["b"], p["skip"]["b"], 1, 1, "reflect")
    return conv2d([h], [p["conv2"]["w"]], p["conv2"]["b"], 1, 1, "reflect",
                  relu_in=True, residual=skip)


def runet_forward(params, x_nchw, filters):
    depth = len(filters)
    x = jnp.transpose(x_nchw, (0, 2, 3, 1))            # NCHW -> NHWC
    # input_layer (no batchnorm): conv -> ReLU -> conv ; input_skip: zero-padded conv.
    # The residual add is fused into the second conv's epilogue.
    h = conv2d([x], [params["in1"]["w"]], params["in1"]["b"], 1, 1, "reflect")
    s = conv2d([x], [params["in_skip"]["w"]], params["in_skip"]["b"], 1, 1, "zeros")
    x1 = conv2d([h], [params["in2"]["w"]], params["in2"]["b"], 1, 1, "reflect",
                relu_in=True, residual=s)

    x_down = [x1]
    for i in range(depth - 2):
        x_down.append(residual_conv(x_down[-1], params["down"][i], stride=2))
    x_bridge = residual_conv(x_down[-1], params["bridge"], stride=2)

    x_up = [x_bridge]
    for i in range(depth - 1):
        u = conv_transpose2x2(x_up[-1], params["up_t"][i]["w"], params["up_t"][i]["b"])
        d = x_down[depth - 2 - i]
        x_up.append(residual_conv_cat(u, d, params["up_res"][i]))

    out = conv2d([x_up[-1]], [params["out"]["w"]], params["out"]["b"], 1, 0, "zeros",
                 act="tanh")                           # 1x1 conv + Tanh
    return jnp.transpose(out, (0, 3, 1, 2))            # back to NCHW (== init_shape)


# ----------------------------------------------------------------------------
# Deterministic parameter init (shapes from RUnet.__init__)
# ----------------------------------------------------------------------------
def init_params(key, channels, filters):
    f = filters
    keys = iter(jax.random.split(key, 128))

    def conv_p(cout, cin, k):
        kw_, kb_ = jax.random.split(next(keys))
        scale = 1.0 / float((cin * k * k) ** 0.5)
        return {"w": scale * jax.random.normal(kw_, (cout, cin, k, k), jnp.float32),
                "b": 0.01 * jax.random.normal(kb_, (cout,), jnp.float32)}

    def convT_p(cin, cout, k):
        kw_, kb_ = jax.random.split(next(keys))
        scale = 1.0 / float((cin * k * k) ** 0.5)
        return {"w": scale * jax.random.normal(kw_, (cin, cout, k, k), jnp.float32),
                "b": 0.01 * jax.random.normal(kb_, (cout,), jnp.float32)}

    def res_p(cin, cout):
        return {"conv1": conv_p(cout, cin, 3),
                "conv2": conv_p(cout, cout, 3),
                "skip": conv_p(cout, cin, 3)}

    p = {
        "in1": conv_p(f[0], channels, 3),
        "in2": conv_p(f[0], f[0], 3),
        "in_skip": conv_p(f[0], channels, 3),
        "down": [res_p(f[i], f[i + 1]) for i in range(len(f) - 2)],
        "bridge": res_p(f[-2], f[-1]),
        "up_t": [],
        "up_res": [],
        "out": conv_p(channels, f[0], 1),
    }
    for i in range(len(f) - 2, -1, -1):
        p["up_t"].append(convT_p(f[i + 1], f[i + 1], 2))
        p["up_res"].append(res_p(f[i] + f[i + 1], f[i]))
    return p


# ----------------------------------------------------------------------------
# Pure-JAX references for spot-checking the Pallas conv kernels
# ----------------------------------------------------------------------------
def conv2d_ref(x, w, b, stride, padding, pad_mode, relu_in=False, act=None, dt=jnp.float32):
    x = x.astype(dt)
    if relu_in:
        x = jnp.maximum(x, 0)
    if padding > 0:
        mode = "reflect" if pad_mode == "reflect" else "constant"
        x = jnp.pad(x, ((0, 0), (padding, padding), (padding, padding), (0, 0)), mode=mode)
    y = lax.conv_general_dilated(
        x, jnp.transpose(w, (2, 3, 1, 0)).astype(dt), (stride, stride), "VALID",
        dimension_numbers=("NHWC", "HWIO", "NHWC"),
        preferred_element_type=jnp.float32)
    y = y + b
    if act == "tanh":
        y = jnp.tanh(y)
    return y


def conv_transpose2x2_ref(x, w, b, dt=jnp.float32):
    n, h, wid, cin = x.shape
    cout = w.shape[1]
    xd = x.astype(dt)
    wd = w.astype(dt)
    y = jnp.zeros((n, 2 * h, 2 * wid, cout), jnp.float32)
    for dy in range(2):
        for dx in range(2):
            y = y.at[:, dy::2, dx::2, :].set(
                jnp.einsum("nhwc,cd->nhwd", xd, wd[:, :, dy, dx],
                           preferred_element_type=jnp.float32))
    return y + b


# ----------------------------------------------------------------------------
if __name__ == "__main__":
    key = jax.random.PRNGKey(0)
    (k_param, k_x, k_c1, k_c2, k_c3, k_c4, k_c5, k_c6, k_c7, k_c8) = jax.random.split(key, 10)

    channels = 4
    filters = [8, 16, 32, 64]
    x = jax.random.normal(k_x, (2, channels, 16, 16), jnp.float32)   # NCHW like PyTorch

    dt = compute_dtype()
    tol = 1e-4 if dt == jnp.float32 else 2e-3

    # --- spot-check the Pallas conv kernels against lax references ---
    xt = jax.random.normal(k_c1, (2, 16, 16, 4), jnp.float32)
    wt = jax.random.normal(k_c2, (8, 4, 3, 3), jnp.float32) / 6.0
    bt = jax.random.normal(k_c3, (8,), jnp.float32) * 0.1
    for stride in (1, 2):
        got = conv2d([xt], [wt], bt, stride=stride, padding=1,
                     pad_mode="reflect", relu_in=True)
        ref = conv2d_ref(xt, wt, bt, stride, 1, "reflect", relu_in=True, dt=dt)
        assert jnp.allclose(got, ref, atol=tol, rtol=tol), "conv2d mismatch"

    # fused residual epilogue
    res = jax.random.normal(k_c6, (2, 16, 16, 8), jnp.float32)
    got_r = conv2d([xt], [wt], bt, 1, 1, "reflect", relu_in=True, residual=res)
    ref_r = conv2d_ref(xt, wt, bt, 1, 1, "reflect", relu_in=True, dt=dt) + res
    assert jnp.allclose(got_r, ref_r, atol=tol, rtol=tol), "fused residual mismatch"

    # dual kernel: conv1(relu(x)) and skip(x) share one slab read
    wskip = jax.random.normal(k_c4, (8, 4, 3, 3), jnp.float32) / 6.0
    bskip = jax.random.normal(k_c5, (8,), jnp.float32) * 0.1
    for stride in (1, 2):
        ga, gb = conv2d_dual([xt], [wt], [wskip], bt, bskip, stride, 1, "reflect")
        ra = conv2d_ref(xt, wt, bt, stride, 1, "reflect", relu_in=True, dt=dt)
        rb = conv2d_ref(xt, wskip, bskip, stride, 1, "reflect", relu_in=False, dt=dt)
        assert jnp.allclose(ga, ra, atol=tol, rtol=tol), "dual conv (a) mismatch"
        assert jnp.allclose(gb, rb, atol=tol, rtol=tol), "dual conv (b) mismatch"

    # split-weight (concat-free) two-input conv
    xb = jax.random.normal(k_c7, (2, 16, 16, 6), jnp.float32)
    wc = jax.random.normal(k_c8, (8, 10, 3, 3), jnp.float32) / 10.0
    got_c = conv2d([xt, xb], [wc[:, :4], wc[:, 4:]], bt, 1, 1, "reflect", relu_in=True)
    ref_c = conv2d_ref(jnp.concatenate([xt, xb], axis=-1), wc, bt, 1, 1,
                       "reflect", relu_in=True, dt=dt)
    assert jnp.allclose(got_c, ref_c, atol=tol, rtol=tol), "split-weight conv mismatch"

    # transpose conv
    xt8 = jax.random.normal(k_c4, (2, 8, 8, 8), jnp.float32)
    wtt = jax.random.normal(k_c5, (8, 8, 2, 2), jnp.float32) / 4.0
    btt = jnp.linspace(-0.1, 0.1, 8, dtype=jnp.float32)
    got_t = conv_transpose2x2(xt8, wtt, btt)
    ref_t = conv_transpose2x2_ref(xt8, wtt, btt, dt=dt)
    assert jnp.allclose(got_t, ref_t, atol=tol, rtol=tol), "conv_transpose mismatch"

    # --- full RUnet forward (jitted) ---
    params = init_params(k_param, channels, filters)
    fwd = jax.jit(functools.partial(runet_forward, filters=filters))
    out = jax.block_until_ready(fwd(params, x))

    assert out.shape == x.shape, (out.shape, x.shape)        # .view(init_shape)
    assert bool(jnp.all(jnp.isfinite(out)))
    assert bool(jnp.all(jnp.abs(out) <= 1.0 + 1e-6))          # Tanh output layer

    print("KERNEL_OK")
</pallas_src>

<mosaic_0001>
module attributes {stable_mosaic.version = 11 : i64} {
  func.func @kernel(%arg0: i32, %arg1: memref<256x36xbf16, #tpu.memory_space<vmem>>, %arg2: memref<36x8xbf16, #tpu.memory_space<vmem>>, %arg3: memref<1x8xf32, #tpu.memory_space<vmem>>, %arg4: memref<256x8xf32, #tpu.memory_space<vmem>>) attributes {dimension_semantics = [#tpu.dimension_semantics<parallel>], iteration_bounds = array<i64: 2>, scalar_prefetch = 0 : i64, scratch_operands = 0 : i64, tpu.core_type = #tpu.core_type<tc>, window_params = [{transform_indices = @transform_0, window_bounds = array<i64: 256, 36>}, {pipeline_mode = #tpu.pipeline_mode<synchronous>, transform_indices = @transform_1, window_bounds = array<i64: 36, 8>}, {pipeline_mode = #tpu.pipeline_mode<synchronous>, transform_indices = @transform_2, window_bounds = array<i64: 1, 8>}, {transform_indices = @transform_3, window_bounds = array<i64: 256, 8>}]} {
    %cst = arith.constant 0.000000e+00 : f32
    %0 = vector.broadcast %cst : f32 to vector<256x8xf32>
    %c0 = arith.constant 0 : index
    %c0_0 = arith.constant 0 : index
    %1 = vector.load %arg1[%c0, %c0_0] : memref<256x36xbf16, #tpu.memory_space<vmem>>, vector<256x36xbf16>
    %cst_1 = arith.constant 0.000000e+00 : bf16
    %2 = vector.broadcast %cst_1 : bf16 to vector<256x36xbf16>
    %3 = arith.maximumf %1, %2 : vector<256x36xbf16>
    %c0_2 = arith.constant 0 : index
    %c0_3 = arith.constant 0 : index
    %4 = vector.load %arg2[%c0_2, %c0_3] : memref<36x8xbf16, #tpu.memory_space<vmem>>, vector<36x8xbf16>
    %cst_4 = arith.constant dense<0.000000e+00> : vector<256x8xf32>
    %5 = tpu.matmul %3, %4, %cst_4 {dimension_numbers = #tpu.dot_dimension_numbers<[1], [0], [0], [1], [0, 0, 1, 1], [], []>} : vector<256x36xbf16>, vector<36x8xbf16>, vector<256x8xf32> -> vector<256x8xf32>
    %6 = arith.addf %0, %5 : vector<256x8xf32>
    %c0_5 = arith.constant 0 : index
    %c0_6 = arith.constant 0 : index
    %7 = vector.load %arg3[%c0_5, %c0_6] : memref<1x8xf32, #tpu.memory_space<vmem>>, vector<1x8xf32>
    %8 = vector.broadcast %7 : vector<1x8xf32> to vector<256x8xf32>
    %9 = arith.addf %6, %8 : vector<256x8xf32>
    %c0_7 = arith.constant 0 : index
    %c0_8 = arith.constant 0 : index
    %10 = vector.load %arg4[%c0_7, %c0_8] : memref<256x8xf32, #tpu.memory_space<vmem>>, vector<256x8xf32>
    tpu.vector_store %arg4[%c0_7, %c0_8], %9 {strides = array<i32>} : memref<256x8xf32, #tpu.memory_space<vmem>>, vector<256x8xf32>,
    return
  }
  func.func @transform_0(%arg0: i32) -> (i32, i32) {
    %c0_i32 = arith.constant 0 : i32
    %c0_i32_0 = arith.constant 0 : i32
    return %arg0, %c0_i32 : i32, i32
  }
  func.func @transform_1(%arg0: i32) -> (i32, i32) {
    %c0_i32 = arith.constant 0 : i32
    %c0_i32_0 = arith.constant 0 : i32
    %c0_i32_1 = arith.constant 0 : i32
    return %c0_i32, %c0_i32_0 : i32, i32
  }
  func.func @transform_2(%arg0: i32) -> (i32, i32) {
    %c0_i32 = arith.constant 0 : i32
    %c0_i32_0 = arith.constant 0 : i32
    %c0_i32_1 = arith.constant 0 : i32
    return %c0_i32, %c0_i32_0 : i32, i32
  }
  func.func @transform_3(%arg0: i32) -> (i32, i32) {
    %c0_i32 = arith.constant 0 : i32
    %c0_i32_0 = arith.constant 0 : i32
    return %arg0, %c0_i32 : i32, i32
  }
}

</mosaic_0001>

<llo_original>
// kernel: tpu_custom_call.1
$region0: #{tpu_custom_call.1}
  #allocation0 [shape = 'u32[]', space=smem, size = 0x4, offset = 0x4, fixed_abs, tag = 'smem constant byte address 0x4 - core index']
  #allocation1 [shape = 'u32[144,128]{1,0:T(1,128)}', space=vmem, size = 0x12000, scoped, tag = 'internal scratch']
  %s0 = inlined_call_operand.vmem [shape: bf16[512,36], index: 0, kind: input, shape index: {}]
  %s1 = inlined_call_operand.vmem [shape: bf16[36,8], index: 1, kind: input, shape index: {}]
  %s2 = inlined_call_operand.vmem [shape: f32[1,8], index: 2, kind: input, shape index: {}]
  %s3 = inlined_call_operand.vmem [shape: f32[512,8], index: 3, kind: output, shape index: {}]
  %s4 = sld [smem:[#allocation0]]
  $region45: #{tpu_custom_call.1} parent=0
    _
  %s6 = ssub.s32 1, %s4
  %s7 = scalar_select 0, %s6, %s4
  loop: start=0, step=1, limit=4
  $region2: #{tpu_custom_call.1} parent=0 // loop_pre_header
    _
  $region3: #{tpu_custom_call.1} parent=0 // loop_header
    %s9 = sphi 0, %s13
    %p10 = scmp.ge.s32.totalorder %s9, 4
    %s19 = sphi 0, %s21
    %s22 = sphi 0, %s19
    %s23 = sphi 0, %s22
    %s39 = sphi 0, %s23
    %s43 = sphi 0, %s43
    %s45 = sphi 0, %s43
    %s46 = sphi 0, %s45
    %s60 = sphi 0, %s46
    %s64 = sphi 0, %s64
    %s66 = sphi 0, %s64
    %s67 = sphi 0, %s66
    %s81 = sphi 0, %s67
    %s87 = sphi 0, %s89
    %s90 = sphi 0, %s87
    %s91 = sphi 0, %s90
    %s107 = sphi 0, %s91
  $region4: #{tpu_custom_call.1} parent=0 // loop_header_branch
    %12 = sbr.rel (%p10) target = $region8
  $region5: #{tpu_custom_call.1} parent=0 // loop_body
    %s14 = ssub.s32 %s9, 1
    %s15 = ssub.s32 %s9, 2
    %s16 = sadd.s32 %s9, 1
    %s17 = ssub.s32 %s9, %s16
    %p18 = scmp.eq.s32.totalorder %s17, 0
    %s20 = sadd.s32 %s19, 1
    %s21 = scalar_select %p18, %s19, %s20
    %p24 = pneg %p18
    %p25 = scmp.eq.s32.totalorder %s9, 1
    %p26 = por %p24, %p25
    %p27 = scmp.ne.s32.totalorder %s19, %s22
    %p28 = scmp.eq.s32.totalorder %s9, 0
    %p29 = por %p27, %p28
    %p30 = scmp.ne.s32.totalorder %s19, %s22
    %p31 = scmp.eq.s32.totalorder %s14, 1
    %p32 = por %p30, %p31
    %p33 = scmp.ne.s32.totalorder %s22, %s23
    %p34 = scmp.eq.s32.totalorder %s14, 0
    %p35 = por %p33, %p34
    %p36 = scmp.ne.s32.totalorder %s22, %s23
    %p37 = scmp.eq.s32.totalorder %s15, 1
    %p38 = por %p36, %p37
    %p40 = scmp.ne.s32.totalorder %s23, %s39
    %p41 = scmp.eq.s32.totalorder %s15, 0
    %p42 = por %p40, %p41
    %s44 = sadd.s32 %s43, 1
    %p47 = scmp.eq.s32.totalorder %s9, 1
    %p48 = scmp.ne.s32.totalorder %s43, %s45
    %p49 = scmp.eq.s32.totalorder %s9, 0
    %p50 = por %p48, %p49
    %p51 = scmp.ne.s32.totalorder %s43, %s45
    %p52 = scmp.eq.s32.totalorder %s14, 1
    %p53 = por %p51, %p52
    %p54 = scmp.ne.s32.totalorder %s45, %s46
    %p55 = scmp.eq.s32.totalorder %s14, 0
    %p56 = por %p54, %p55
    %p57 = scmp.ne.s32.totalorder %s45, %s46
    %p58 = scmp.eq.s32.totalorder %s15, 1
    %p59 = por %p57, %p58
    %p61 = scmp.ne.s32.totalorder %s46, %s60
    %p62 = scmp.eq.s32.totalorder %s15, 0
    %p63 = por %p61, %p62
    %s65 = sadd.s32 %s64, 1
    %p68 = scmp.eq.s32.totalorder %s9, 1
    %p69 = scmp.ne.s32.totalorder %s64, %s66
    %p70 = scmp.eq.s32.totalorder %s9, 0
    %p71 = por %p69, %p70
    %p72 = scmp.ne.s32.totalorder %s64, %s66
    %p73 = scmp.eq.s32.totalorder %s14, 1
    %p74 = por %p72, %p73
    %p75 = scmp.ne.s32.totalorder %s66, %s67
    %p76 = scmp.eq.s32.totalorder %s14, 0
    %p77 = por %p75, %p76
    %p78 = scmp.ne.s32.totalorder %s66, %s67
    %p79 = scmp.eq.s32.totalorder %s15, 1
    %p80 = por %p78, %p79
    %p82 = scmp.ne.s32.totalorder %s67, %s81
    %p83 = scmp.eq.s32.totalorder %s15, 0
    %p84 = por %p82, %p83
    %s85 = ssub.s32 %s9, %s16
    %p86 = scmp.eq.s32.totalorder %s85, 0
    %s88 = sadd.s32 %s87, 1
    %s89 = scalar_select %p86, %s87, %s88
    %p92 = pneg %p86
    %p93 = scmp.eq.s32.totalorder %s9, 1
    %p94 = por %p92, %p93
    %p95 = scmp.ne.s32.totalorder %s87, %s90
    %p96 = scmp.eq.s32.totalorder %s9, 0
    %p97 = por %p95, %p96
    %p98 = scmp.ne.s32.totalorder %s87, %s90
    %p99 = scmp.eq.s32.totalorder %s14, 1
    %p100 = por %p98, %p99
    %p101 = scmp.ne.s32.totalorder %s90, %s91
    %p102 = scmp.eq.s32.totalorder %s14, 0
    %p103 = por %p101, %p102
    %p104 = scmp.ne.s32.totalorder %s90, %s91
    %p105 = scmp.eq.s32.totalorder %s15, 1
    %p106 = por %p104, %p105
    %p108 = scmp.ne.s32.totalorder %s91, %s107
    %p109 = scmp.eq.s32.totalorder %s15, 0
    %p110 = por %p108, %p109
    %p111 = scmp.le.s32.totalorder 1, %s9
    %p112 = scmp.lt.s32.totalorder %s9, 3
    %p113 = pnand %p111, %p112
    %p114 = pneg %p113
    // Predicated region
    $region9: #{tpu_custom_call.1} parent=5 // pred_check
      _
    $region10: #{tpu_custom_call.1} parent=5 // pred_check_branch
      %116 = sbr.rel (%p113) target = $region12
    $region11: #{tpu_custom_call.1} parent=5 // pred_region
      %s117 = ssub.s32 %s9, 1
      // Predicated region
      $region13: #{tpu_custom_call.1} parent=11 // pred_check
        %p118 = pneg %p56
      $region14: #{tpu_custom_call.1} parent=11 // pred_check_branch
        %120 = sbr.rel (%p118) target = $region16
      $region15: #{tpu_custom_call.1} parent=11 // pred_region
        _
      $region16: #{tpu_custom_call.1} parent=11 // pred_fallthru
        _
      // Predicated region
      $region17: #{tpu_custom_call.1} parent=11 // pred_check
        %p121 = pneg %p77
      $region18: #{tpu_custom_call.1} parent=11 // pred_check_branch
        %123 = sbr.rel (%p121) target = $region20
      $region19: #{tpu_custom_call.1} parent=11 // pred_region
        _
      $region20: #{tpu_custom_call.1} parent=11 // pred_fallthru
        _
    $region12: #{tpu_custom_call.1} parent=5 // pred_fallthru
      _
    %p124 = scmp.lt.s32.totalorder %s9, 2
    // Predicated region
    $region21: #{tpu_custom_call.1} parent=5 // pred_check
      %p125 = pneg %p124
    $region22: #{tpu_custom_call.1} parent=5 // pred_check_branch
      %127 = sbr.rel (%p125) target = $region24
    $region23: #{tpu_custom_call.1} parent=5 // pred_region
      // Predicated region
      $region25: #{tpu_custom_call.1} parent=23 // pred_check
        %p128 = pneg %p29
      $region26: #{tpu_custom_call.1} parent=23 // pred_check_branch
        %130 = sbr.rel (%p128) target = $region28
      $region27: #{tpu_custom_call.1} parent=23 // pred_region
        %s131 = smul.u32 32, %s9
        %p132 = scmp.lt.s32.totalorder %s131, 63
        %s133 = scalar_select %p132, %s131, 63
        %s134 = smul.addr %s133, 4
        %s135 = scalar_lea.vmem %s0, %s134
        %s136 = smul.u32 32, %s9
      $region28: #{tpu_custom_call.1} parent=23 // pred_fallthru
        _
    $region24: #{tpu_custom_call.1} parent=5 // pred_fallthru
      _
    %p137 = scmp.le.s32.totalorder 1, %s9
    %p138 = scmp.lt.s32.totalorder %s9, 3
    %p139 = pnand %p137, %p138
    %p140 = pneg %p139
    // Predicated region
    $region29: #{tpu_custom_call.1} parent=5 // pred_check
      _
    $region30: #{tpu_custom_call.1} parent=5 // pred_check_branch
      %142 = sbr.rel (%p139) target = $region32
    $region31: #{tpu_custom_call.1} parent=5 // pred_region
      %s143 = ssub.s32 %s9, 1
      %s144 = smul.u32 32, %s14
      %p145 = scmp.lt.s32.totalorder %s144, 63
      %s146 = scalar_select %p145, %s144, 63
      %s147 = smul.addr %s146, 4
      %s148 = scalar_lea.vmem %s0, %s147
      %p149 = pneg %p35
      %p150 = pneg %p32
      %p151 = pneg %p56
      %p152 = pneg %p53
      %p153 = pneg %p77
      %p154 = pneg %p74
      %p155 = pneg %p103
      %p156 = pneg %p100
      %s157 = smul.u32 32, %s14
      %p158 = scmp.lt.s32.totalorder %s157, 63
      %s159 = scalar_select %p158, %s157, 63
      %s160 = smul.addr %s159, 8
      %s161 = scalar_lea.vmem %s3, %s160
      %s162 = smul.u32 32, %s14
      %p163 = scmp.lt.s32.totalorder %s162, 63
      %s164 = scalar_select %p163, %s162, 63
      %s165 = smul.addr %s164, 4
      %s166 = scalar_lea.vmem %s0, %s165
      %s167 = smul.u32 32, %s14
      %s168 = smul.u32 32, %s14
      %p169 = scmp.lt.s32.totalorder %s168, 63
      %s170 = scalar_select %p169, %s168, 63
      %s171 = smul.addr %s170, 8
      %s172 = scalar_lea.vmem %s3, %s171
      %s173 = smul.u32 32, %s14
      %v175 = vld [vmem:[%s166] sm:$0xf]
      %v176 = vld [vmem:[%s166 + $0x4] sm:$0xf]
      %v177 = vld [vmem:[%s166 + $0x8] sm:$0xf]
      %v178 = vld [vmem:[%s166 + $0xc] sm:$0xf]
      %v179 = vld [vmem:[%s166 + $0x10] sm:$0xf]
      %v180 = vld [vmem:[%s166 + $0x14] sm:$0xf]
      %v181 = vld [vmem:[%s166 + $0x18] sm:$0xf]
      %v182 = vld [vmem:[%s166 + $0x1c] sm:$0xf]
      %v183 = vld [vmem:[%s166 + $0x20] sm:$0xf]
      %v184 = vld [vmem:[%s166 + $0x24] sm:$0xf]
      %v185 = vld [vmem:[%s166 + $0x28] sm:$0xf]
      %v186 = vld [vmem:[%s166 + $0x2c] sm:$0xf]
      %v187 = vld [vmem:[%s166 + $0x30] sm:$0xf]
      %v188 = vld [vmem:[%s166 + $0x34] sm:$0xf]
      %v189 = vld [vmem:[%s166 + $0x38] sm:$0xf]
      %v190 = vld [vmem:[%s166 + $0x3c] sm:$0xf]
      %v191 = vld [vmem:[%s166 + $0x40] sm:$0xf]
      %v192 = vld [vmem:[%s166 + $0x44] sm:$0xf]
      %v193 = vld [vmem:[%s166 + $0x48] sm:$0xf]
      %v194 = vld [vmem:[%s166 + $0x4c] sm:$0xf]
      %v195 = vld [vmem:[%s166 + $0x50] sm:$0xf]
      %v196 = vld [vmem:[%s166 + $0x54] sm:$0xf]
      %v197 = vld [vmem:[%s166 + $0x58] sm:$0xf]
      %v198 = vld [vmem:[%s166 + $0x5c] sm:$0xf]
      %v199 = vld [vmem:[%s166 + $0x60] sm:$0xf]
      %v200 = vld [vmem:[%s166 + $0x64] sm:$0xf]
      %v201 = vld [vmem:[%s166 + $0x68] sm:$0xf]
      %v202 = vld [vmem:[%s166 + $0x6c] sm:$0xf]
      %v203 = vld [vmem:[%s166 + $0x70] sm:$0xf]
      %v204 = vld [vmem:[%s166 + $0x74] sm:$0xf]
      %v205 = vld [vmem:[%s166 + $0x78] sm:$0xf]
      %v206 = vld [vmem:[%s166 + $0x7c] sm:$0xf]
      %v207 = vmax.bf16 %v175, 0
      %v208 = vmax.bf16 %v176, 0
      %v209 = vmax.bf16 %v177, 0
      %v210 = vmax.bf16 %v178, 0
      %v211 = vmax.bf16 %v179, 0
      %v212 = vmax.bf16 %v180, 0
      %v213 = vmax.bf16 %v181, 0
      %v214 = vmax.bf16 %v182, 0
      %v215 = vmax.bf16 %v183, 0
      %v216 = vmax.bf16 %v184, 0
      %v217 = vmax.bf16 %v185, 0
      %v218 = vmax.bf16 %v186, 0
      %v219 = vmax.bf16 %v187, 0
      %v220 = vmax.bf16 %v188, 0
      %v221 = vmax.bf16 %v189, 0
      %v222 = vmax.bf16 %v190, 0
      %v223 = vmax.bf16 %v191, 0
      %v224 = vmax.bf16 %v192, 0
      %v225 = vmax.bf16 %v193, 0
      %v226 = vmax.bf16 %v194, 0
      %v227 = vmax.bf16 %v195, 0
      %v228 = vmax.bf16 %v196, 0
      %v229 = vmax.bf16 %v197, 0
      %v230 = vmax.bf16 %v198, 0
      %v231 = vmax.bf16 %v199, 0
      %v232 = vmax.bf16 %v200, 0
      %v233 = vmax.bf16 %v201, 0
      %v234 = vmax.bf16 %v202, 0
      %v235 = vmax.bf16 %v203, 0
      %v236 = vmax.bf16 %v204, 0
      %v237 = vmax.bf16 %v205, 0
      %v238 = vmax.bf16 %v206, 0
      %v239 = vld [vmem:[%s1] sm:$0xf]
      %v240 = vld [vmem:[%s1 + $0x4] sm:$0xf]
      %v241 = vld [vmem:[%s1 + $0x8] sm:$0xf]
      %v242 = vld [vmem:[%s1 + $0xc] sm:$0xf]
      %v243 = vld [vmem:[%s1 + $0x10] sm:$0x3]
      %v244 = vld [vmem:[%s2] sm:$0x1]
      %v246 = vlaneseq
      %v247 = vshrl.u32 %v246, 7
      %v248 = vsub.s32 0, %v247
      %v249 = vrot.slane %v244, %v248
      %v283 = vunpack.c.l.b16 %v207
      %v284 = vunpack.c.l.b16 %v208
      %v285 = vunpack.c.l.b16 %v209
      %v286 = vunpack.c.l.b16 %v210
      %v287 = vunpack.c.l.b16 %v211
      %v288 = vunpack.c.l.b16 %v212
      %v289 = vunpack.c.l.b16 %v213
      %v290 = vunpack.c.l.b16 %v214
      %v291 = vunpack.c.l.b16 %v215
      %v292 = vunpack.c.l.b16 %v216
      %v293 = vunpack.c.l.b16 %v217
      %v294 = vunpack.c.l.b16 %v218
      %v295 = vunpack.c.l.b16 %v219
      %v296 = vunpack.c.l.b16 %v220
      %v297 = vunpack.c.l.b16 %v221
      %v298 = vunpack.c.l.b16 %v222
      %v299 = vunpack.c.l.b16 %v223
      %v300 = vunpack.c.l.b16 %v224
      %v301 = vunpack.c.l.b16 %v225
      %v302 = vunpack.c.l.b16 %v226
      %v303 = vunpack.c.l.b16 %v227
      %v304 = vunpack.c.l.b16 %v228
      %v305 = vunpack.c.l.b16 %v229
      %v306 = vunpack.c.l.b16 %v230
      %v307 = vunpack.c.l.b16 %v231
      %v308 = vunpack.c.l.b16 %v232
      %v309 = vunpack.c.l.b16 %v233
      %v310 = vunpack.c.l.b16 %v234
      %v311 = vunpack.c.l.b16 %v235
      %v312 = vunpack.c.l.b16 %v236
      %v313 = vunpack.c.l.b16 %v237
      %v314 = vunpack.c.l.b16 %v238
      %v315 = vpack.c.b16 %v284, %v283
      %v316 = vpack.c.b16 %v286, %v285
      %v317 = vpack.c.b16 %v288, %v287
      %v318 = vpack.c.b16 %v290, %v289
      %v319 = vpack.c.b16 %v292, %v291
      %v320 = vpack.c.b16 %v294, %v293
      %v321 = vpack.c.b16 %v296, %v295
      %v322 = vpack.c.b16 %v298, %v297
      %v323 = vpack.c.b16 %v300, %v299
      %v324 = vpack.c.b16 %v302, %v301
      %v325 = vpack.c.b16 %v304, %v303
      %v326 = vpack.c.b16 %v306, %v305
      %v327 = vpack.c.b16 %v308, %v307
      %v328 = vpack.c.b16 %v310, %v309
      %v329 = vpack.c.b16 %v312, %v311
      %v330 = vpack.c.b16 %v314, %v313
      %v336 = vunpack.c.l.b16 %v239
      %v337 = vunpack.c.l.b16 %v240
      %v338 = vunpack.c.l.b16 %v241
      %v339 = vunpack.c.l.b16 %v242
      %v340 = vunpack.c.l.b16 %v243
      %v341 = vpack.c.b16 %v337, %v336
      %v342 = vpack.c.b16 %v339, %v338
      %v343 = vpack.c.b16 %v340, %v340
      %vm346 = vcmask 293888
      %v348 = vsel %vm346, %v315, 0
      %v351 = vsel %vm346, %v316, 0
      %v354 = vsel %vm346, %v317, 0
      %v357 = vsel %vm346, %v318, 0
      %v360 = vsel %vm346, %v319, 0
      %v363 = vsel %vm346, %v320, 0
      %v366 = vsel %vm346, %v321, 0
      %v369 = vsel %vm346, %v322, 0
      %v372 = vsel %vm346, %v323, 0
      %v375 = vsel %vm346, %v324, 0
      %v378 = vsel %vm346, %v325, 0
      %v381 = vsel %vm346, %v326, 0
      %v384 = vsel %vm346, %v327, 0
      %v387 = vsel %vm346, %v328, 0
      %v390 = vsel %vm346, %v329, 0
      %v393 = vsel %vm346, %v330, 0
      %vm395 = vcmask 1041408
      %v397 = vsel %vm395, %v343, 0
      %399 = vmatprep.subr.bf16.mxu0 0
      %400 = vmatpush1.bf16.msra.mxu0 0
      %401 = vmatprep.subr.bf16.mxu0 0
      %402 = vmatpush1.bf16.msra.mxu0 0
      %403 = vmatprep.subr.bf16.mxu0 0
      %404 = vmatpush1.bf16.msra.mxu0 0
      %405 = vmatprep.subr.bf16.mxu0 0
      %406 = vmatpush1.bf16.msra.mxu0 0
      %407 = vmatprep.subr.bf16.mxu0 0
      %408 = vmatpush1.bf16.msra.mxu0 0
      %409 = vmatprep.subr.bf16.mxu0 0
      %410 = vmatpush1.bf16.msra.mxu0 %v397
      %411 = vmatprep.subr.bf16.mxu0 0
      %412 = vmatpush1.bf16.msra.mxu0 %v342
      %413 = vmatprep.subr.bf16.mxu0 0
      %414 = vmatpush1.bf16.msra.mxu0 %v341
      %415 = vmatprep.subr.bf16.mxu0 0
      %416 = vmatpush2.bf16.msra.mxu0 0
      %417 = vmatprep.subr.bf16.mxu0 0
      %418 = vmatpush2.bf16.msra.mxu0 0
      %419 = vmatprep.subr.bf16.mxu0 0
      %420 = vmatpush2.bf16.msra.mxu0 0
      %421 = vmatprep.subr.bf16.mxu0 0
      %422 = vmatpush2.bf16.msra.mxu0 0
      %423 = vmatprep.subr.bf16.mxu0 0
      %424 = vmatpush2.bf16.msra.mxu0 0
      %425 = vmatprep.subr.bf16.mxu0 0
      %426 = vmatpush2.bf16.msra.mxu0 0
      %427 = vmatprep.subr.bf16.mxu0 0
      %428 = vmatpush2.bf16.msra.mxu0 0
      %429 = vmatprep.subr.bf16.mxu0 0
      %430 = vmatpush2.bf16.msra.mxu0 0
      %431 = vmatprep.mubr.bf16.mxu0 0
      %432 = vmatmul.mubr.bf16.gmra.mxu0 %v348
      %v433 = vpop.f32.mrf.mxu0
      %v434 = vadd.f32 %v249, %v433
      %v435 = vpop.f32.mrf.mxu0
      %v436 = vpop.f32.mrf.mxu0
      %v437 = vadd.f32 %v249, %v436
      %v438 = vpop.f32.mrf.mxu0
      %439 = vmatprep.mubr.bf16.mxu0 0
      %440 = vmatmul.mubr.bf16.gmra.mxu0 %v351
      %v441 = vpop.f32.mrf.mxu0
      %v442 = vadd.f32 %v249, %v441
      %v443 = vpop.f32.mrf.mxu0
      %v444 = vpop.f32.mrf.mxu0
      %v445 = vadd.f32 %v249, %v444
      %v446 = vpop.f32.mrf.mxu0
      %447 = vmatprep.mubr.bf16.mxu0 0
      %448 = vmatmul.mubr.bf16.gmra.mxu0 %v354
      %v449 = vpop.f32.mrf.mxu0
      %v450 = vadd.f32 %v249, %v449
      %v451 = vpop.f32.mrf.mxu0
      %v452 = vpop.f32.mrf.mxu0
      %v453 = vadd.f32 %v249, %v452
      %v454 = vpop.f32.mrf.mxu0
      %455 = vmatprep.mubr.bf16.mxu0 0
      %456 = vmatmul.mubr.bf16.gmra.mxu0 %v357
      %v457 = vpop.f32.mrf.mxu0
      %v458 = vadd.f32 %v249, %v457
      %v459 = vpop.f32.mrf.mxu0
      %v460 = vpop.f32.mrf.mxu0
      %v461 = vadd.f32 %v249, %v460
      %v462 = vpop.f32.mrf.mxu0
      %463 = vmatprep.mubr.bf16.mxu0 0
      %464 = vmatmul.mubr.bf16.gmra.mxu0 %v360
      %v465 = vpop.f32.mrf.mxu0
      %v466 = vadd.f32 %v249, %v465
      %v467 = vpop.f32.mrf.mxu0
      %v468 = vpop.f32.mrf.mxu0
      %v469 = vadd.f32 %v249, %v468
      %v470 = vpop.f32.mrf.mxu0
      %471 = vmatprep.mubr.bf16.mxu0 0
      %472 = vmatmul.mubr.bf16.gmra.mxu0 %v363
      %v473 = vpop.f32.mrf.mxu0
      %v474 = vadd.f32 %v249, %v473
      %v475 = vpop.f32.mrf.mxu0
      %v476 = vpop.f32.mrf.mxu0
      %v477 = vadd.f32 %v249, %v476
      %v478 = vpop.f32.mrf.mxu0
      %479 = vmatprep.mubr.bf16.mxu0 0
      %480 = vmatmul.mubr.bf16.gmra.mxu0 %v366
      %v481 = vpop.f32.mrf.mxu0
      %v482 = vadd.f32 %v249, %v481
      %v483 = vpop.f32.mrf.mxu0
      %v484 = vpop.f32.mrf.mxu0
      %v485 = vadd.f32 %v249, %v484
      %v486 = vpop.f32.mrf.mxu0
      %487 = vmatprep.mubr.bf16.mxu0 0
      %488 = vmatmul.mubr.bf16.gmra.mxu0 %v369
      %v489 = vpop.f32.mrf.mxu0
      %v490 = vadd.f32 %v249, %v489
      %v491 = vpop.f32.mrf.mxu0
      %v492 = vpop.f32.mrf.mxu0
      %v493 = vadd.f32 %v249, %v492
      %v494 = vpop.f32.mrf.mxu0
      %495 = vmatprep.mubr.bf16.mxu0 0
      %496 = vmatmul.mubr.bf16.gmra.mxu0 %v372
      %v497 = vpop.f32.mrf.mxu0
      %v498 = vadd.f32 %v249, %v497
      %v499 = vpop.f32.mrf.mxu0
      %v500 = vpop.f32.mrf.mxu0
      %v501 = vadd.f32 %v249, %v500
      %v502 = vpop.f32.mrf.mxu0
      %503 = vmatprep.mubr.bf16.mxu0 0
      %504 = vmatmul.mubr.bf16.gmra.mxu0 %v375
      %v505 = vpop.f32.mrf.mxu0
      %v506 = vadd.f32 %v249, %v505
      %v507 = vpop.f32.mrf.mxu0
      %v508 = vpop.f32.mrf.mxu0
      %v509 = vadd.f32 %v249, %v508
      %v510 = vpop.f32.mrf.mxu0
      %511 = vmatprep.mubr.bf16.mxu0 0
      %512 = vmatmul.mubr.bf16.gmra.mxu0 %v378
      %v513 = vpop.f32.mrf.mxu0
      %v514 = vadd.f32 %v249, %v513
      %v515 = vpop.f32.mrf.mxu0
      %v516 = vpop.f32.mrf.mxu0
      %v517 = vadd.f32 %v249, %v516
      %v518 = vpop.f32.mrf.mxu0
      %519 = vmatprep.mubr.bf16.mxu0 0
      %520 = vmatmul.mubr.bf16.gmra.mxu0 %v381
      %v521 = vpop.f32.mrf.mxu0
      %v522 = vadd.f32 %v249, %v521
      %v523 = vpop.f32.mrf.mxu0
      %v524 = vpop.f32.mrf.mxu0
      %v525 = vadd.f32 %v249, %v524
      %v526 = vpop.f32.mrf.mxu0
      %527 = vmatprep.mubr.bf16.mxu0 0
      %528 = vmatmul.mubr.bf16.gmra.mxu0 %v384
      %v529 = vpop.f32.mrf.mxu0
      %v530 = vadd.f32 %v249, %v529
      %v531 = vpop.f32.mrf.mxu0
      %v532 = vpop.f32.mrf.mxu0
      %v533 = vadd.f32 %v249, %v532
      %v534 = vpop.f32.mrf.mxu0
      %535 = vmatprep.mubr.bf16.mxu0 0
      %536 = vmatmul.mubr.bf16.gmra.mxu0 %v387
      %v537 = vpop.f32.mrf.mxu0
      %v538 = vadd.f32 %v249, %v537
      %v539 = vpop.f32.mrf.mxu0
      %v540 = vpop.f32.mrf.mxu0
      %v541 = vadd.f32 %v249, %v540
      %v542 = vpop.f32.mrf.mxu0
      %543 = vmatprep.mubr.bf16.mxu0 0
      %544 = vmatmul.mubr.bf16.gmra.mxu0 %v390
      %v545 = vpop.f32.mrf.mxu0
      %v546 = vadd.f32 %v249, %v545
      %v547 = vpop.f32.mrf.mxu0
      %v548 = vpop.f32.mrf.mxu0
      %v549 = vadd.f32 %v249, %v548
      %v550 = vpop.f32.mrf.mxu0
      %551 = vmatprep.mubr.bf16.mxu0 0
      %552 = vmatmul.mubr.bf16.gmra.mxu0 %v393
      %v553 = vpop.f32.mrf.mxu0
      %v554 = vadd.f32 %v249, %v553
      %v555 = vpop.f32.mrf.mxu0
      %v556 = vpop.f32.mrf.mxu0
      %v557 = vadd.f32 %v249, %v556
      %v558 = vpop.f32.mrf.mxu0
      %559 = vdwg.mxu0
      %vm560 = vcmask 64512
      %561 = vst.msk [vmem:[%s172] sm:$0xff] %vm560, %v434
      %562 = vst.msk [vmem:[%s172 + $0x8] sm:$0xff] %vm560, %v437
      %563 = vst.msk [vmem:[%s172 + $0x10] sm:$0xff] %vm560, %v442
      %564 = vst.msk [vmem:[%s172 + $0x18] sm:$0xff] %vm560, %v445
      %565 = vst.msk [vmem:[%s172 + $0x20] sm:$0xff] %vm560, %v450
      %566 = vst.msk [vmem:[%s172 + $0x28] sm:$0xff] %vm560, %v453
      %567 = vst.msk [vmem:[%s172 + $0x30] sm:$0xff] %vm560, %v458
      %568 = vst.msk [vmem:[%s172 + $0x38] sm:$0xff] %vm560, %v461
      %569 = vst.msk [vmem:[%s172 + $0x40] sm:$0xff] %vm560, %v466
      %570 = vst.msk [vmem:[%s172 + $0x48] sm:$0xff] %vm560, %v469
      %571 = vst.msk [vmem:[%s172 + $0x50] sm:$0xff] %vm560, %v474
      %572 = vst.msk [vmem:[%s172 + $0x58] sm:$0xff] %vm560, %v477
      %573 = vst.msk [vmem:[%s172 + $0x60] sm:$0xff] %vm560, %v482
      %574 = vst.msk [vmem:[%s172 + $0x68] sm:$0xff] %vm560, %v485
      %575 = vst.msk [vmem:[%s172 + $0x70] sm:$0xff] %vm560, %v490
      %576 = vst.msk [vmem:[%s172 + $0x78] sm:$0xff] %vm560, %v493
      %577 = vst.msk [vmem:[%s172 + $0x80] sm:$0xff] %vm560, %v498
      %578 = vst.msk [vmem:[%s172 + $0x88] sm:$0xff] %vm560, %v501
      %579 = vst.msk [vmem:[%s172 + $0x90] sm:$0xff] %vm560, %v506
      %580 = vst.msk [vmem:[%s172 + $0x98] sm:$0xff] %vm560, %v509
      %581 = vst.msk [vmem:[%s172 + $0xa0] sm:$0xff] %vm560, %v514
      %582 = vst.msk [vmem:[%s172 + $0xa8] sm:$0xff] %vm560, %v517
      %583 = vst.msk [vmem:[%s172 + $0xb0] sm:$0xff] %vm560, %v522
      %584 = vst.msk [vmem:[%s172 + $0xb8] sm:$0xff] %vm560, %v525
      %585 = vst.msk [vmem:[%s172 + $0xc0] sm:$0xff] %vm560, %v530
      %586 = vst.msk [vmem:[%s172 + $0xc8] sm:$0xff] %vm560, %v533
      %587 = vst.msk [vmem:[%s172 + $0xd0] sm:$0xff] %vm560, %v538
      %588 = vst.msk [vmem:[%s172 + $0xd8] sm:$0xff] %vm560, %v541
      %589 = vst.msk [vmem:[%s172 + $0xe0] sm:$0xff] %vm560, %v546
      %590 = vst.msk [vmem:[%s172 + $0xe8] sm:$0xff] %vm560, %v549
      %591 = vst.msk [vmem:[%s172 + $0xf0] sm:$0xff] %vm560, %v554
      %592 = vst.msk [vmem:[%s172 + $0xf8] sm:$0xff] %vm560, %v557
      %s593 = smul.u32 32, %s14
      %p594 = scmp.lt.s32.totalorder %s593, 63
      %s595 = scalar_select %p594, %s593, 63
      %s596 = smul.addr %s595, 8
      %s597 = scalar_lea.vmem %s3, %s596
      // Predicated region
      $region33: #{tpu_custom_call.1} parent=31 // pred_check
        %p598 = pneg %p100
      $region34: #{tpu_custom_call.1} parent=31 // pred_check_branch
        %600 = sbr.rel (%p598) target = $region36
      $region35: #{tpu_custom_call.1} parent=31 // pred_region
        %s601 = smul.u32 32, %s14
      $region36: #{tpu_custom_call.1} parent=31 // pred_fallthru
        _
    $region32: #{tpu_custom_call.1} parent=5 // pred_fallthru
      _
    %p602 = scmp.le.s32.totalorder 2, %s9
    // Predicated region
    $region37: #{tpu_custom_call.1} parent=5 // pred_check
      %p603 = pneg %p602
    $region38: #{tpu_custom_call.1} parent=5 // pred_check_branch
      %605 = sbr.rel (%p603) target = $region40
    $region39: #{tpu_custom_call.1} parent=5 // pred_region
      %s606 = ssub.s32 %s9, 2
      // Predicated region
      $region41: #{tpu_custom_call.1} parent=39 // pred_check
        %p607 = pneg %p106
      $region42: #{tpu_custom_call.1} parent=39 // pred_check_branch
        %609 = sbr.rel (%p607) target = $region44
      $region43: #{tpu_custom_call.1} parent=39 // pred_region
        %s610 = smul.u32 32, %s15
        %p611 = scmp.lt.s32.totalorder %s610, 63
        %s612 = scalar_select %p611, %s610, 63
        %s613 = smul.addr %s612, 8
        %s614 = scalar_lea.vmem %s3, %s613
      $region44: #{tpu_custom_call.1} parent=39 // pred_fallthru
        _
    $region40: #{tpu_custom_call.1} parent=5 // pred_fallthru
      _
  $region6: #{tpu_custom_call.1} parent=0 // loop_footer
    %s13 = sadd.s32 1, %s9
  $region7: #{tpu_custom_call.1} parent=0 // loop_footer_branch
    %8 = sbr.rel target = $region3
  $region8: #{tpu_custom_call.1} parent=0 // loop_exit
    _

</llo_original>
